<compile_context>
chip_gen: v6e
topology: v6e:2x2x1
jax: 0.10.0
libtpu: 0.0.40
codegen_flags: <defaults>
</compile_context>

<pallas_src>
import math
import functools

import numpy as np
import jax
import jax.numpy as jnp
from jax.experimental import pallas as pl
from jax.experimental.pallas import tpu as pltpu


def _round_up(x: int, m: int) -> int:
    return ((x + m - 1) // m) * m


def _host_freqs(num_channels: int, downscale_freq_shift: float, max_period: int):
    """Frequency table, computed once on the host (float64 -> float32)."""
    half_dim = num_channels // 2
    exponent = (-math.log(max_period)) * np.arange(half_dim, dtype=np.float64)
    exponent = exponent / (half_dim - downscale_freq_shift)
    return np.exp(exponent).astype(np.float32)  # (half_dim,)


def _timestep_embedding_kernel(
    t_ref,        # (TN, 1)        float32, VMEM
    freqs_ref,    # (1, half_dim)  float32, VMEM (same block every grid step)
    out_ref,      # (TN, C)        float32, VMEM
    *,
    num_channels: int,
    flip_sin_to_cos: bool,
    scale: float,
):
    tn = t_ref.shape[0]
    half_dim = num_channels // 2

    t = t_ref[...]                      # (TN, 1)
    freqs = freqs_ref[...]              # (1, half_dim)
    arg = t * freqs                     # broadcast -> (TN, half_dim)
    if scale != 1.0:                    # static Python check: free when scale==1
        arg = arg * jnp.float32(scale)

    sin_part = jnp.sin(arg)
    cos_part = jnp.cos(arg)

    if flip_sin_to_cos:
        first, second = cos_part, sin_part
    else:
        first, second = sin_part, cos_part

    # Direct slice stores: no lane-axis concatenation / full-tile temporary.
    out_ref[:, :half_dim] = first.astype(out_ref.dtype)
    out_ref[:, half_dim:2 * half_dim] = second.astype(out_ref.dtype)
    if num_channels % 2 == 1:
        out_ref[:, 2 * half_dim:] = jnp.zeros(
            (tn, num_channels - 2 * half_dim), dtype=out_ref.dtype
        )


def timesteps_forward(
    timesteps: jax.Array,
    num_channels: int,
    flip_sin_to_cos: bool,
    downscale_freq_shift: float,
    scale: float = 1.0,
    max_period: int = 10000,
    row_tile: int = 512,
):
    """Pallas equivalent of diffusers' Timesteps.forward / get_timestep_embedding."""
    assert timesteps.ndim == 1, "Timesteps should be a 1d-array"
    assert num_channels >= 2, "num_channels must be >= 2"
    half_dim = num_channels // 2
    assert float(half_dim) != float(downscale_freq_shift), (
        "half_dim == downscale_freq_shift would divide by zero"
    )

    n = timesteps.shape[0]

    # Host-side (trace-time) frequency table.
    freqs2d = jnp.asarray(
        _host_freqs(num_channels, downscale_freq_shift, max_period).reshape(
            1, half_dim
        )
    )

    # Row tiling: multiple of 8 sublanes; pad N up so every block is dense.
    if n <= row_tile:
        tn = _round_up(max(n, 1), 8)
    else:
        tn = _round_up(row_tile, 8)
    n_pad = _round_up(n, tn)
    grid_n = n_pad // tn

    t2d = jnp.pad(timesteps.astype(jnp.float32), (0, n_pad - n)).reshape(n_pad, 1)

    kernel = functools.partial(
        _timestep_embedding_kernel,
        num_channels=num_channels,
        flip_sin_to_cos=flip_sin_to_cos,
        scale=float(scale),
    )

    out_padded = pl.pallas_call(
        kernel,
        out_shape=jax.ShapeDtypeStruct((n_pad, num_channels), jnp.float32),
        grid=(grid_n,),
        in_specs=[
            pl.BlockSpec((tn, 1), lambda i: (i, 0)),
            pl.BlockSpec((1, half_dim), lambda i: (0, 0)),
        ],
        out_specs=pl.BlockSpec((tn, num_channels), lambda i: (i, 0)),
        compiler_params=pltpu.CompilerParams(
            dimension_semantics=("parallel",),
        ),
    )(t2d, freqs2d)

    return out_padded[:n]


def _reference(timesteps, num_channels, flip_sin_to_cos, downscale_freq_shift,
               scale=1.0, max_period=10000):
    """Pure-JAX reference mirroring the PyTorch get_timestep_embedding."""
    half_dim = num_channels // 2
    freqs = jnp.asarray(
        _host_freqs(num_channels, downscale_freq_shift, max_period)
    )
    arg = timesteps[:, None].astype(jnp.float32) * freqs[None, :]
    if scale != 1.0:
        arg = arg * jnp.float32(scale)
    sin_part, cos_part = jnp.sin(arg), jnp.cos(arg)
    if flip_sin_to_cos:
        emb = jnp.concatenate([cos_part, sin_part], axis=-1)
    else:
        emb = jnp.concatenate([sin_part, cos_part], axis=-1)
    if num_channels % 2 == 1:
        emb = jnp.pad(emb, ((0, 0), (0, 1)))
    return emb


if __name__ == "__main__":
    key = jax.random.PRNGKey(0)

    # Case 1: typical diffusion config (even channels, cos-first ordering).
    num_channels = 32
    flip_sin_to_cos = True
    downscale_freq_shift = 1.0
    scale = 1.0
    timesteps = jax.random.uniform(key, (8,), dtype=jnp.float32) * 1000.0

    out = timesteps_forward(
        timesteps, num_channels, flip_sin_to_cos, downscale_freq_shift, scale
    )
    out = jax.block_until_ready(out)
    ref = _reference(
        timesteps, num_channels, flip_sin_to_cos, downscale_freq_shift, scale
    )
    assert out.shape == (8, num_channels), out.shape
    # f32 sin/cos of args up to ~1000 can differ by ~1e-4 between
    # implementations; tolerance reflects that, not a semantic gap.
    assert jnp.allclose(out, ref, atol=2e-3, rtol=1e-3), float(
        jnp.max(jnp.abs(out - ref))
    )

    # Case 2: odd channel count, sin-first, scale != 1, N not a multiple of 8
    # (exercises the zero-pad column, the static scale path, and row padding).
    num_channels2 = 15
    timesteps2 = jnp.arange(5, dtype=jnp.float32) * 37.0 + 0.5
    out2 = timesteps_forward(timesteps2, num_channels2, False, 0.0, 2.0)
    out2 = jax.block_until_ready(out2)
    ref2 = _reference(timesteps2, num_channels2, False, 0.0, 2.0)
    assert out2.shape == (5, num_channels2), out2.shape
    assert jnp.allclose(out2, ref2, atol=2e-3, rtol=1e-3), float(
        jnp.max(jnp.abs(out2 - ref2))
    )

    print("KERNEL_OK")
</pallas_src>

<mosaic_0001>
module attributes {stable_mosaic.version = 11 : i64} {
  func.func @_timestep_embedding_kernel(%arg0: i32, %arg1: memref<8x1xf32, #tpu.memory_space<vmem>>, %arg2: memref<1x16xf32, #tpu.memory_space<vmem>>, %arg3: memref<8x32xf32, #tpu.memory_space<vmem>>) attributes {dimension_semantics = [#tpu.dimension_semantics<parallel>], iteration_bounds = array<i64: 1>, scalar_prefetch = 0 : i64, scratch_operands = 0 : i64, tpu.core_type = #tpu.core_type<tc>, window_params = [{transform_indices = @transform_0, window_bounds = array<i64: 8, 1>}, {pipeline_mode = #tpu.pipeline_mode<synchronous>, transform_indices = @transform_1, window_bounds = array<i64: 1, 16>}, {transform_indices = @transform_2, window_bounds = array<i64: 8, 32>}]} {
    %c0 = arith.constant 0 : index
    %c0_0 = arith.constant 0 : index
    %0 = vector.load %arg1[%c0, %c0_0] : memref<8x1xf32, #tpu.memory_space<vmem>>, vector<8x1xf32>
    %c0_1 = arith.constant 0 : index
    %c0_2 = arith.constant 0 : index
    %1 = vector.load %arg2[%c0_1, %c0_2] : memref<1x16xf32, #tpu.memory_space<vmem>>, vector<1x16xf32>
    %2 = vector.broadcast %0 : vector<8x1xf32> to vector<8x16xf32>
    %3 = vector.broadcast %1 : vector<1x16xf32> to vector<8x16xf32>
    %4 = arith.mulf %2, %3 : vector<8x16xf32>
    %5 = math.sin %4 : vector<8x16xf32>
    %6 = math.cos %4 : vector<8x16xf32>
    %c0_3 = arith.constant 0 : index
    %c0_4 = arith.constant 0 : index
    %7 = vector.load %arg3[%c0_3, %c0_4] : memref<8x32xf32, #tpu.memory_space<vmem>>, vector<8x16xf32>
    tpu.vector_store %arg3[%c0_3, %c0_4], %6 {strides = array<i32>} : memref<8x32xf32, #tpu.memory_space<vmem>>, vector<8x16xf32>,
    %c0_5 = arith.constant 0 : index
    %c16 = arith.constant 16 : index
    %8 = vector.load %arg3[%c0_5, %c16] : memref<8x32xf32, #tpu.memory_space<vmem>>, vector<8x16xf32>
    tpu.vector_store %arg3[%c0_5, %c16], %5 {strides = array<i32>} : memref<8x32xf32, #tpu.memory_space<vmem>>, vector<8x16xf32>,
    return
  }
  func.func @transform_0(%arg0: i32) -> (i32, i32) {
    %c0_i32 = arith.constant 0 : i32
    %c0_i32_0 = arith.constant 0 : i32
    return %arg0, %c0_i32 : i32, i32
  }
  func.func @transform_1(%arg0: i32) -> (i32, i32) {
    %c0_i32 = arith.constant 0 : i32
    %c0_i32_0 = arith.constant 0 : i32
    %c0_i32_1 = arith.constant 0 : i32
    return %c0_i32, %c0_i32_0 : i32, i32
  }
  func.func @transform_2(%arg0: i32) -> (i32, i32) {
    %c0_i32 = arith.constant 0 : i32
    %c0_i32_0 = arith.constant 0 : i32
    return %arg0, %c0_i32 : i32, i32
  }
}

</mosaic_0001>

<llo_original>
// kernel: tpu_custom_call.1
$region0: #{tpu_custom_call.1}
  #allocation0 [shape = 'u32[]', space=smem, size = 0x4, offset = 0x4, fixed_abs, tag = 'smem constant byte address 0x4 - core index']
  #allocation1 [shape = 'u32[144,128]{1,0:T(1,128)}', space=vmem, size = 0x12000, scoped, tag = 'internal scratch']
  %s0 = inlined_call_operand.vmem [shape: f32[8,1], index: 0, kind: input, shape index: {}]
  %s1 = inlined_call_operand.vmem [shape: f32[1,16], index: 1, kind: input, shape index: {}]
  %s2 = inlined_call_operand.hbm [shape: f32[8,32], index: 2, kind: output, shape index: {}]
  %s3 = sld [smem:[#allocation0]]
  $region18: #{tpu_custom_call.1} parent=0
    _
  %s5 = ssub.s32 1, %s3
  %s6 = scalar_select 0, %s5, %s3
  $region1: #{tpu_custom_call.1} parent=0
    #allocation2 [shape = 'u8[4096]{0}', space=vmem, size = 0x1000, scoped, tag = 'output window, operand 0, single buffered']
    #allocation3 [shape = 's32[1]{0}', space=sflag, size = 0x4, scoped, tag = 'scoped memory for tpu_custom_call.1']
    %7 = vsyncpa [#allocation3], 0
    // Predicated region
    $region2: #{tpu_custom_call.1} parent=1 // pred_check
      _
    $region3: #{tpu_custom_call.1} parent=1 // pred_check_branch
      %9 = sbr.rel (0) target = $region5
    $region4: #{tpu_custom_call.1} parent=1 // pred_region
      _
    $region5: #{tpu_custom_call.1} parent=1 // pred_fallthru
      _
    // Predicated region
    $region6: #{tpu_custom_call.1} parent=1 // pred_check
      _
    $region7: #{tpu_custom_call.1} parent=1 // pred_check_branch
      %11 = sbr.rel (0) target = $region9
    $region8: #{tpu_custom_call.1} parent=1 // pred_region
      _
    $region9: #{tpu_custom_call.1} parent=1 // pred_fallthru
      _
    %v12 = vld [vmem:[%s0] sm:$0xff]
    %v13 = vld [vmem:[%s1] sm:$0x1]
    %15 = vset.pattern.permute.xlu0 0
    %16 = vperm.xlu0 %15, %v12
    %v17 = vpop.permute.xlu0 %16
    %v20 = vlaneseq
    %v21 = vshrl.u32 %v20, 7
    %v22 = vsub.s32 0, %v21
    %v23 = vrot.slane %v13, %v22
    %v25 = vmul.f32 %v17, %v23
    %v26 = vand.u32 2147483647, %v25
    %vm27 = vcmp.le.f32.partialorder %v26, 0.7853982
    %vm28 = vcmp.lt.s32.totalorder %v25, 0
    %v29 = vand.u32 %v25, 2139095040
    %v30 = vshrl.u32 %v29, 23
    %v31 = vsub.s32 %v30, 127
    %v32 = vand.u32 2147483647, %v25
    %v33 = vand.u32 %v32, 8388607
    %v34 = vor.u32 %v33, 8388608
    %v35 = vsub.s32 0, %v34
    %v36 = vadd.s32 %v31, 1
    %vm37 = vcmp.gt.s32.totalorder %v36, 0
    %v38 = vsel %vm37, %v36, 0
    %v39 = vshrl.u32 %v38, 5
    %v40 = vand.u32 %v38, 31
    %v41 = vsub.s32 32, %v40
    %v42 = vshrl.u32 683565275, %v41
    %v43 = vshll.u32 683565275, %v40
    %v44 = vshrl.u32 2475754826, %v41
    %v45 = vor.u32 %v43, %v44
    %v46 = vshll.u32 2475754826, %v40
    %v47 = vshrl.u32 2131351028, %v41
    %v48 = vor.u32 %v46, %v47
    %v49 = vshll.u32 2131351028, %v40
    %v50 = vshrl.u32 2102212464, %v41
    %v51 = vor.u32 %v49, %v50
    %v52 = vshll.u32 2102212464, %v40
    %v53 = vshrl.u32 920167782, %v41
    %v54 = vor.u32 %v52, %v53
    %v55 = vshll.u32 920167782, %v40
    %v56 = vshrl.u32 1326507024, %v41
    %v57 = vor.u32 %v55, %v56
    %vm58 = vcmp.lt.s32.totalorder %v39, 1
    %vm59 = vcmp.lt.s32.totalorder %v39, 2
    %vm60 = vcmp.lt.s32.totalorder %v39, 3
    %vm61 = vcmp.lt.s32.totalorder %v39, 4
    %v62 = vsel %vm58, %v42, %v45
    %v63 = vsel %vm61, %v51, 2102212464
    %v64 = vsel %vm60, %v48, %v63
    %v65 = vsel %vm59, %v62, %v64
    %v66 = vsel %vm58, %v45, %v48
    %v67 = vsel %vm61, %v54, 920167782
    %v68 = vsel %vm60, %v51, %v67
    %v69 = vsel %vm59, %v66, %v68
    %v70 = vsel %vm58, %v48, %v51
    %v71 = vsel %vm61, %v57, 1326507024
    %v72 = vsel %vm60, %v54, %v71
    %v73 = vsel %vm59, %v70, %v72
    %v74 = vshll.u32 %v34, 8
    %v75 = vmul.u32.u64.compose %v74, %v73
    %v76 = vextract.low.u32 %v75
    %v77 = vextract.high.u32 %v75
    %v78 = vmul.u32.u64.compose %v74, %v69
    %v79 = vextract.low.u32 %v78
    %v80 = vextract.high.u32 %v78
    %v81 = vmul.u32 %v74, %v65
    %v82 = vadd.s32 %v77, %v79
    %vm83 = vc.u32 %v77, %v79
    %v84 = vadd.s32 %v80, 1
    %v85 = vsel %vm83, %v84, %v80
    %v86 = vadd.s32 %v81, %v85
    %v87 = vadd.s32 %v86, 536870912
    %v88 = vshrl.u32 %v87, 30
    %v89 = vshll.u32 %v88, 30
    %v90 = vsub.s32 %v86, %v89
    %vm91 = vcmp.lt.s32.totalorder %v90, 0
    %v92 = vsub.s32 0, %v90
    %v93 = vsel %vm91, %v92, %v90
    %v94 = vclz %v93
    %v95 = vsub.s32 %v94, 2
    %vm96 = vcmp.gt.s32.totalorder 0, %v95
    %v97 = vsel %vm96, 0, %v95
    %v98 = vsub.s32 32, %v97
    %v99 = vshll.u32 %v90, %v97
    %v100 = vshrl.u32 %v82, %v98
    %v101 = vor.u32 %v99, %v100
    %v102 = vsub.s32 4294967266, %v97
    %v103 = vadd.s32 %v102, 127
    %v104 = vshll.u32 %v103, 23
    %v105 = vor.u32 4788187, %v104
    %v106 = vand.u32 2147483647, %v105
    %v108 = vcvt.s32.f32 %v101
    %v109 = vmul.f32 %v108, %v106
    %v110 = vxor.u32 %v109, 2147483648
    %v111 = vsel %vm28, %v110, %v109
    %v112 = vsub.s32 4, %v88
    %v113 = vsel %vm28, %v112, %v88
    %v114 = vsel %vm27, %v25, %v111
    %v115 = vsel %vm27, 0, %v113
    %v116 = vcosq.f32.pop %v114
    %v117 = vsinq.f32.pop %v114
    %vm118 = vweird.f32 %v25
    %v119 = vadd.s32 %v115, 3
    %v120 = vand.u32 %v119, 3
    %vm121 = vcmp.lt.s32.totalorder %v120, 2
    %vm122 = vcmp.eq.s32.totalorder %v120, 0
    %v123 = vxor.u32 %v117, 2147483648
    %v124 = vsel %vm122, %v116, %v123
    %vm125 = vcmp.eq.s32.totalorder %v120, 2
    %v126 = vxor.u32 %v116, 2147483648
    %v127 = vsel %vm125, %v126, %v117
    %v128 = vsel %vm121, %v124, %v127
    %v129 = vsel %vm118, nan, %v128
    %v130 = vand.u32 2147483647, %v25
    %vm131 = vcmp.le.f32.partialorder %v130, 0.7853982
    %vm132 = vcmp.lt.s32.totalorder %v25, 0
    %v133 = vand.u32 %v25, 2139095040
    %v134 = vshrl.u32 %v133, 23
    %v135 = vsub.s32 %v134, 127
    %v136 = vand.u32 2147483647, %v25
    %v137 = vand.u32 %v136, 8388607
    %v138 = vor.u32 %v137, 8388608
    %v139 = vsub.s32 0, %v138
    %v140 = vadd.s32 %v135, 1
    %vm141 = vcmp.gt.s32.totalorder %v140, 0
    %v142 = vsel %vm141, %v140, 0
    %v143 = vshrl.u32 %v142, 5
    %v144 = vand.u32 %v142, 31
    %v145 = vsub.s32 32, %v144
    %v146 = vshrl.u32 683565275, %v145
    %v147 = vshll.u32 683565275, %v144
    %v148 = vshrl.u32 2475754826, %v145
    %v149 = vor.u32 %v147, %v148
    %v150 = vshll.u32 2475754826, %v144
    %v151 = vshrl.u32 2131351028, %v145
    %v152 = vor.u32 %v150, %v151
    %v153 = vshll.u32 2131351028, %v144
    %v154 = vshrl.u32 2102212464, %v145
    %v155 = vor.u32 %v153, %v154
    %v156 = vshll.u32 2102212464, %v144
    %v157 = vshrl.u32 920167782, %v145
    %v158 = vor.u32 %v156, %v157
    %v159 = vshll.u32 920167782, %v144
    %v160 = vshrl.u32 1326507024, %v145
    %v161 = vor.u32 %v159, %v160
    %vm162 = vcmp.lt.s32.totalorder %v143, 1
    %vm163 = vcmp.lt.s32.totalorder %v143, 2
    %vm164 = vcmp.lt.s32.totalorder %v143, 3
    %vm165 = vcmp.lt.s32.totalorder %v143, 4
    %v166 = vsel %vm162, %v146, %v149
    %v167 = vsel %vm165, %v155, 2102212464
    %v168 = vsel %vm164, %v152, %v167
    %v169 = vsel %vm163, %v166, %v168
    %v170 = vsel %vm162, %v149, %v152
    %v171 = vsel %vm165, %v158, 920167782
    %v172 = vsel %vm164, %v155, %v171
    %v173 = vsel %vm163, %v170, %v172
    %v174 = vsel %vm162, %v152, %v155
    %v175 = vsel %vm165, %v161, 1326507024
    %v176 = vsel %vm164, %v158, %v175
    %v177 = vsel %vm163, %v174, %v176
    %v178 = vshll.u32 %v138, 8
    %v179 = vmul.u32.u64.compose %v178, %v177
    %v180 = vextract.low.u32 %v179
    %v181 = vextract.high.u32 %v179
    %v182 = vmul.u32.u64.compose %v178, %v173
    %v183 = vextract.low.u32 %v182
    %v184 = vextract.high.u32 %v182
    %v185 = vmul.u32 %v178, %v169
    %v186 = vadd.s32 %v181, %v183
    %vm187 = vc.u32 %v181, %v183
    %v188 = vadd.s32 %v184, 1
    %v189 = vsel %vm187, %v188, %v184
    %v190 = vadd.s32 %v185, %v189
    %v191 = vadd.s32 %v190, 536870912
    %v192 = vshrl.u32 %v191, 30
    %v193 = vshll.u32 %v192, 30
    %v194 = vsub.s32 %v190, %v193
    %vm195 = vcmp.lt.s32.totalorder %v194, 0
    %v196 = vsub.s32 0, %v194
    %v197 = vsel %vm195, %v196, %v194
    %v198 = vclz %v197
    %v199 = vsub.s32 %v198, 2
    %vm200 = vcmp.gt.s32.totalorder 0, %v199
    %v201 = vsel %vm200, 0, %v199
    %v202 = vsub.s32 32, %v201
    %v203 = vshll.u32 %v194, %v201
    %v204 = vshrl.u32 %v186, %v202
    %v205 = vor.u32 %v203, %v204
    %v206 = vsub.s32 4294967266, %v201
    %v207 = vadd.s32 %v206, 127
    %v208 = vshll.u32 %v207, 23
    %v209 = vor.u32 4788187, %v208
    %v210 = vand.u32 2147483647, %v209
    %v212 = vcvt.s32.f32 %v205
    %v213 = vmul.f32 %v212, %v210
    %v214 = vxor.u32 %v213, 2147483648
    %v215 = vsel %vm132, %v214, %v213
    %v216 = vsub.s32 4, %v192
    %v217 = vsel %vm132, %v216, %v192
    %v218 = vsel %vm131, %v25, %v215
    %v219 = vsel %vm131, 0, %v217
    %v220 = vcosq.f32.pop %v218
    %v221 = vsinq.f32.pop %v218
    %vm222 = vweird.f32 %v25
    %v223 = vand.u32 %v219, 3
    %vm224 = vcmp.lt.s32.totalorder %v223, 2
    %vm225 = vcmp.eq.s32.totalorder %v223, 0
    %v226 = vxor.u32 %v221, 2147483648
    %v227 = vsel %vm225, %v220, %v226
    %vm228 = vcmp.eq.s32.totalorder %v223, 2
    %v229 = vxor.u32 %v220, 2147483648
    %v230 = vsel %vm228, %v229, %v221
    %v231 = vsel %vm224, %v227, %v230
    %v232 = vsel %vm222, nan, %v231
    %vm233 = vcmask 130048
    %234 = vst.msk [vmem:[#allocation2] sm:$0xff] %vm233, %v232
    %236 = vrot.lane.b32.xlu0 %v129, 16
    %v237 = vpop.permute.xlu0 %236
    %vm239 = vcmask 261248
    %240 = vst.msk [vmem:[#allocation2] sm:$0xff] %vm239, %v237
    // Predicated region
    $region10: #{tpu_custom_call.1} parent=1 // pred_check
      _
    $region11: #{tpu_custom_call.1} parent=1 // pred_check_branch
      %242 = sbr.rel (0) target = $region13
    $region12: #{tpu_custom_call.1} parent=1 // pred_region
      %s244 = ssub.s32 128, 128
      %245 = vsyncadd [#allocation3], %s244
      %s247 = sshll.u32 [#allocation2], 4
      %s248 = int_to_ptr.vmem [resolvable:$true] %s247
      %250 = dma.vmem_to_hbm [thread:$0]  %s248, 128, %s2, [#allocation3]
    $region13: #{tpu_custom_call.1} parent=1 // pred_fallthru
      _
    // Predicated region
    $region14: #{tpu_custom_call.1} parent=1 // pred_check
      _
    $region15: #{tpu_custom_call.1} parent=1 // pred_check_branch
      %252 = sbr.rel (0) target = $region17
    $region16: #{tpu_custom_call.1} parent=1 // pred_region
      %253 = dma.done [#allocation3], 128
    $region17: #{tpu_custom_call.1} parent=1 // pred_fallthru
      _
    %254 = vsyncpa [#allocation3], 1

</llo_original>
